<compile_context>
chip_gen: v7x
topology: tpu7x:2x2x1
jax: 0.10.0
libtpu: 0.0.40
codegen_flags: <defaults>
</compile_context>

<pallas_src>
import jax
import jax.numpy as jnp
from jax.experimental import pallas as pl
from jax.experimental.pallas import tpu as pltpu

LANE = 128   # vreg lane width / f32 lane tiling
SUBLANE = 8  # f32 sublane tiling


def mlp_kernel(x_ref, w1_ref, b1_ref, w2_ref, b2_ref, w3_ref, b3_ref, o_ref):
    # hidden1 + ReLU
    h1 = jnp.dot(x_ref[...], w1_ref[...], preferred_element_type=jnp.float32)
    h1 = jnp.maximum(h1 + b1_ref[...], 0.0)
    # hidden2 + ReLU
    h2 = jnp.dot(h1, w2_ref[...], preferred_element_type=jnp.float32)
    h2 = jnp.maximum(h2 + b2_ref[...], 0.0)
    # hidden3 (no activation); output lane-padded to a multiple of 128
    out = jnp.dot(h2, w3_ref[...], preferred_element_type=jnp.float32) + b3_ref[...]
    o_ref[...] = out.astype(o_ref.dtype)


def mlp_forward(x, w1, b1, w2, b2, w3, b3, *, tm=512):
    """x: (B, close_size) f32; weights (in, out); biases (1, out). Returns (B, out_dim)."""
    B, in_dim = x.shape
    hidden = w1.shape[1]
    out_dim = w3.shape[1]

    # --- Lane-dense output: pad the last GEMM's N dim to a multiple of 128. ---
    out_pad = max(LANE, pl.cdiv(out_dim, LANE) * LANE)
    w3p = jnp.pad(w3, ((0, 0), (0, out_pad - out_dim)))
    b3p = jnp.pad(b3, ((0, 0), (0, out_pad - out_dim)))

    # --- Batch tiling: TM multiple of 8 (f32 sublane), capped at padded B. ---
    tm = max(SUBLANE, (min(tm, B + SUBLANE - 1) // SUBLANE) * SUBLANE)
    b_pad = pl.cdiv(B, tm) * tm
    x_p = jnp.pad(x, ((0, b_pad - B), (0, 0)))
    grid = (b_pad // tm,)

    flops = 2 * b_pad * (in_dim * hidden + hidden * hidden + hidden * out_pad)
    bytes_accessed = 4 * (
        b_pad * in_dim                       # x
        + in_dim * hidden + hidden           # w1, b1
        + hidden * hidden + hidden           # w2, b2
        + hidden * out_pad + out_pad         # w3, b3 (padded)
        + b_pad * out_pad                    # output
    )

    out_padded = pl.pallas_call(
        mlp_kernel,
        out_shape=jax.ShapeDtypeStruct((b_pad, out_pad), jnp.float32),
        grid=grid,
        in_specs=[
            pl.BlockSpec((tm, in_dim), lambda i: (i, 0)),        # x tile marches over batch
            pl.BlockSpec((in_dim, hidden), lambda i: (0, 0)),    # W1 resident in VMEM
            pl.BlockSpec((1, hidden), lambda i: (0, 0)),         # b1 resident
            pl.BlockSpec((hidden, hidden), lambda i: (0, 0)),    # W2 resident
            pl.BlockSpec((1, hidden), lambda i: (0, 0)),         # b2 resident
            pl.BlockSpec((hidden, out_pad), lambda i: (0, 0)),   # W3 (lane-padded) resident
            pl.BlockSpec((1, out_pad), lambda i: (0, 0)),        # b3 (lane-padded) resident
        ],
        out_specs=pl.BlockSpec((tm, out_pad), lambda i: (i, 0)),
        compiler_params=pltpu.CompilerParams(
            dimension_semantics=("parallel",),   # batch tiles shard across v7x's 2 TCs
            vmem_limit_bytes=32 * 1024 * 1024,   # safe on v7x's 64 MiB physical VMEM
        ),
        cost_estimate=pl.CostEstimate(
            flops=flops, transcendentals=0, bytes_accessed=bytes_accessed
        ),
    )(x_p, w1, b1, w2, b2, w3p, b3p)

    # Strip batch padding and lane padding.
    return out_padded[:B, :out_dim]


def mlp_reference(x, w1, b1, w2, b2, w3, b3):
    h1 = jnp.maximum(x @ w1 + b1, 0.0)
    h2 = jnp.maximum(h1 @ w2 + b2, 0.0)
    return h2 @ w3 + b3


if __name__ == "__main__":
    # Hyperparameters implied by the module (args.close_size, args.hidden_dim, args.out_dim).
    batch = 256         # small, but enough for multiple grid steps with tm=128
    close_size = 8      # args.close_size == input_size
    hidden_dim = 32     # args.hidden_dim
    out_dim = 4         # args.out_dim

    key = jax.random.PRNGKey(0)
    kx, k1, k2, k3, kb1, kb2, kb3 = jax.random.split(key, 7)

    # Input as the module sees it: (B, close_size, 1) -> .squeeze() -> (B, close_size).
    # axis=-1 so a size-1 batch would not also be squeezed away.
    x_raw = jax.random.normal(kx, (batch, close_size, 1), dtype=jnp.float32)
    x = jnp.squeeze(x_raw, axis=-1)

    # Deterministic parameter init (uniform ~ PyTorch Linear default scale),
    # stored as (in, out) so the kernel needs no transpose.
    def init_linear(kw, kb, fan_in, fan_out):
        bound = 1.0 / (fan_in ** 0.5)
        w = jax.random.uniform(kw, (fan_in, fan_out), jnp.float32, -bound, bound)
        b = jax.random.uniform(kb, (1, fan_out), jnp.float32, -bound, bound)
        return w, b

    w1, b1 = init_linear(k1, kb1, close_size, hidden_dim)
    w2, b2 = init_linear(k2, kb2, hidden_dim, hidden_dim)
    w3, b3 = init_linear(k3, kb3, hidden_dim, out_dim)

    out = mlp_forward(x, w1, b1, w2, b2, w3, b3, tm=128)
    out = jax.block_until_ready(out)

    ref = mlp_reference(x, w1, b1, w2, b2, w3, b3)
    assert out.shape == (batch, out_dim)
    assert jnp.allclose(out, ref, atol=1e-5, rtol=1e-5), "mismatch vs reference"

    print("KERNEL_OK")
</pallas_src>

<mosaic_0001>
module attributes {stable_mosaic.version = 11 : i64} {
  func.func @mlp_kernel(%arg0: i32, %arg1: memref<128x8xf32, #tpu.memory_space<vmem>>, %arg2: memref<8x32xf32, #tpu.memory_space<vmem>>, %arg3: memref<1x32xf32, #tpu.memory_space<vmem>>, %arg4: memref<32x32xf32, #tpu.memory_space<vmem>>, %arg5: memref<1x32xf32, #tpu.memory_space<vmem>>, %arg6: memref<32x128xf32, #tpu.memory_space<vmem>>, %arg7: memref<1x128xf32, #tpu.memory_space<vmem>>, %arg8: memref<128x128xf32, #tpu.memory_space<vmem>>) attributes {dimension_semantics = [#tpu.dimension_semantics<parallel>], iteration_bounds = array<i64: 2>, scalar_prefetch = 0 : i64, scratch_operands = 0 : i64, tpu.core_type = #tpu.core_type<tc>, window_params = [{transform_indices = @transform_0, window_bounds = array<i64: 128, 8>}, {pipeline_mode = #tpu.pipeline_mode<synchronous>, transform_indices = @transform_1, window_bounds = array<i64: 8, 32>}, {pipeline_mode = #tpu.pipeline_mode<synchronous>, transform_indices = @transform_2, window_bounds = array<i64: 1, 32>}, {pipeline_mode = #tpu.pipeline_mode<synchronous>, transform_indices = @transform_3, window_bounds = array<i64: 32, 32>}, {pipeline_mode = #tpu.pipeline_mode<synchronous>, transform_indices = @transform_4, window_bounds = array<i64: 1, 32>}, {pipeline_mode = #tpu.pipeline_mode<synchronous>, transform_indices = @transform_5, window_bounds = array<i64: 32, 128>}, {pipeline_mode = #tpu.pipeline_mode<synchronous>, transform_indices = @transform_6, window_bounds = array<i64: 1, 128>}, {transform_indices = @transform_7, window_bounds = array<i64: 128, 128>}]} {
    %c0 = arith.constant 0 : index
    %c0_0 = arith.constant 0 : index
    %0 = vector.load %arg1[%c0, %c0_0] : memref<128x8xf32, #tpu.memory_space<vmem>>, vector<128x8xf32>
    %c0_1 = arith.constant 0 : index
    %c0_2 = arith.constant 0 : index
    %1 = vector.load %arg2[%c0_1, %c0_2] : memref<8x32xf32, #tpu.memory_space<vmem>>, vector<8x32xf32>
    %cst = arith.constant dense<0.000000e+00> : vector<128x32xf32>
    %2 = tpu.matmul %0, %1, %cst {dimension_numbers = #tpu.dot_dimension_numbers<[1], [0], [0], [1], [0, 0, 1, 1], [], []>} : vector<128x8xf32>, vector<8x32xf32>, vector<128x32xf32> -> vector<128x32xf32>
    %c0_3 = arith.constant 0 : index
    %c0_4 = arith.constant 0 : index
    %3 = vector.load %arg3[%c0_3, %c0_4] : memref<1x32xf32, #tpu.memory_space<vmem>>, vector<1x32xf32>
    %4 = vector.broadcast %3 : vector<1x32xf32> to vector<128x32xf32>
    %5 = arith.addf %2, %4 : vector<128x32xf32>
    %cst_5 = arith.constant 0.000000e+00 : f32
    %6 = vector.broadcast %cst_5 : f32 to vector<128x32xf32>
    %7 = arith.maximumf %5, %6 : vector<128x32xf32>
    %c0_6 = arith.constant 0 : index
    %c0_7 = arith.constant 0 : index
    %8 = vector.load %arg4[%c0_6, %c0_7] : memref<32x32xf32, #tpu.memory_space<vmem>>, vector<32x32xf32>
    %cst_8 = arith.constant dense<0.000000e+00> : vector<128x32xf32>
    %9 = tpu.matmul %7, %8, %cst_8 {dimension_numbers = #tpu.dot_dimension_numbers<[1], [0], [0], [1], [0, 0, 1, 1], [], []>} : vector<128x32xf32>, vector<32x32xf32>, vector<128x32xf32> -> vector<128x32xf32>
    %c0_9 = arith.constant 0 : index
    %c0_10 = arith.constant 0 : index
    %10 = vector.load %arg5[%c0_9, %c0_10] : memref<1x32xf32, #tpu.memory_space<vmem>>, vector<1x32xf32>
    %11 = vector.broadcast %10 : vector<1x32xf32> to vector<128x32xf32>
    %12 = arith.addf %9, %11 : vector<128x32xf32>
    %cst_11 = arith.constant 0.000000e+00 : f32
    %13 = vector.broadcast %cst_11 : f32 to vector<128x32xf32>
    %14 = arith.maximumf %12, %13 : vector<128x32xf32>
    %c0_12 = arith.constant 0 : index
    %c0_13 = arith.constant 0 : index
    %15 = vector.load %arg6[%c0_12, %c0_13] : memref<32x128xf32, #tpu.memory_space<vmem>>, vector<32x128xf32>
    %cst_14 = arith.constant dense<0.000000e+00> : vector<128x128xf32>
    %16 = tpu.matmul %14, %15, %cst_14 {dimension_numbers = #tpu.dot_dimension_numbers<[1], [0], [0], [1], [0, 0, 1, 1], [], []>} : vector<128x32xf32>, vector<32x128xf32>, vector<128x128xf32> -> vector<128x128xf32>
    %c0_15 = arith.constant 0 : index
    %c0_16 = arith.constant 0 : index
    %17 = vector.load %arg7[%c0_15, %c0_16] : memref<1x128xf32, #tpu.memory_space<vmem>>, vector<1x128xf32>
    %18 = vector.broadcast %17 : vector<1x128xf32> to vector<128x128xf32>
    %19 = arith.addf %16, %18 : vector<128x128xf32>
    %c0_17 = arith.constant 0 : index
    %c0_18 = arith.constant 0 : index
    %20 = vector.load %arg8[%c0_17, %c0_18] : memref<128x128xf32, #tpu.memory_space<vmem>>, vector<128x128xf32>
    tpu.vector_store %arg8[%c0_17, %c0_18], %19 {strides = array<i32>} : memref<128x128xf32, #tpu.memory_space<vmem>>, vector<128x128xf32>,
    return
  }
  func.func @transform_0(%arg0: i32) -> (i32, i32) {
    %c0_i32 = arith.constant 0 : i32
    %c0_i32_0 = arith.constant 0 : i32
    return %arg0, %c0_i32 : i32, i32
  }
  func.func @transform_1(%arg0: i32) -> (i32, i32) {
    %c0_i32 = arith.constant 0 : i32
    %c0_i32_0 = arith.constant 0 : i32
    %c0_i32_1 = arith.constant 0 : i32
    return %c0_i32, %c0_i32_0 : i32, i32
  }
  func.func @transform_2(%arg0: i32) -> (i32, i32) {
    %c0_i32 = arith.constant 0 : i32
    %c0_i32_0 = arith.constant 0 : i32
    %c0_i32_1 = arith.constant 0 : i32
    return %c0_i32, %c0_i32_0 : i32, i32
  }
  func.func @transform_3(%arg0: i32) -> (i32, i32) {
    %c0_i32 = arith.constant 0 : i32
    %c0_i32_0 = arith.constant 0 : i32
    %c0_i32_1 = arith.constant 0 : i32
    return %c0_i32, %c0_i32_0 : i32, i32
  }
  func.func @transform_4(%arg0: i32) -> (i32, i32) {
    %c0_i32 = arith.constant 0 : i32
    %c0_i32_0 = arith.constant 0 : i32
    %c0_i32_1 = arith.constant 0 : i32
    return %c0_i32, %c0_i32_0 : i32, i32
  }
  func.func @transform_5(%arg0: i32) -> (i32, i32) {
    %c0_i32 = arith.constant 0 : i32
    %c0_i32_0 = arith.constant 0 : i32
    %c0_i32_1 = arith.constant 0 : i32
    return %c0_i32, %c0_i32_0 : i32, i32
  }
  func.func @transform_6(%arg0: i32) -> (i32, i32) {
    %c0_i32 = arith.constant 0 : i32
    %c0_i32_0 = arith.constant 0 : i32
    %c0_i32_1 = arith.constant 0 : i32
    return %c0_i32, %c0_i32_0 : i32, i32
  }
  func.func @transform_7(%arg0: i32) -> (i32, i32) {
    %c0_i32 = arith.constant 0 : i32
    %c0_i32_0 = arith.constant 0 : i32
    return %arg0, %c0_i32 : i32, i32
  }
}

</mosaic_0001>

<llo_original>
// kernel: tpu_custom_call.1
$region0: #{tpu_custom_call.1}
  #allocation0 [shape = 'u32[]', space=smem, size = 0x4, offset = 0x4, fixed_abs, tag = 'smem constant byte address 0x4 - core index']
  #allocation1 [shape = 'u32[144,128]{1,0:T(1,128)}', space=vmem, size = 0x12000, scoped, tag = 'internal scratch']
  %s0 = inlined_call_operand.vmem [shape: f32[256,8], index: 0, kind: input, shape index: {}]
  %s1 = inlined_call_operand.vmem [shape: f32[8,32], index: 1, kind: input, shape index: {}]
  %s2 = inlined_call_operand.vmem [shape: f32[1,32], index: 2, kind: input, shape index: {}]
  %s3 = inlined_call_operand.vmem [shape: f32[32,32], index: 3, kind: input, shape index: {}]
  %s4 = inlined_call_operand.vmem [shape: f32[1,32], index: 4, kind: input, shape index: {}]
  %s5 = inlined_call_operand.vmem [shape: f32[32,128], index: 5, kind: input, shape index: {}]
  %s6 = inlined_call_operand.vmem [shape: f32[1,128], index: 6, kind: input, shape index: {}]
  %s7 = inlined_call_operand.hbm [shape: f32[256,128], index: 7, kind: output, shape index: {}]
  %s8 = sld [smem:[#allocation0]]
  $region61: #{tpu_custom_call.1} parent=0
    _
  %s10 = ssub.s32 1, %s8
  %s11 = scalar_select 0, %s10, %s8
  $region1: #{tpu_custom_call.1} parent=0
    #allocation2 [shape = 'u8[131072]{0}', space=vmem, size = 0x20000, scoped, tag = 'output window, operand 0']
    #allocation3 [shape = 's32[2]{0}', space=sflag, size = 0x8, scoped, tag = 'scoped memory for tpu_custom_call.1']
    %12 = vsyncpa [#allocation3], 0
    %s13 = scalar_lea.sflag [#allocation3], 1
    %14 = vsyncpa %s13, 0
    loop: start=0, step=1, limit=4
    $region2: #{tpu_custom_call.1} parent=1 // loop_pre_header
      _
    $region3: #{tpu_custom_call.1} parent=1 // loop_header
      %s16 = sphi 0, %s20
      %p17 = scmp.ge.s32.totalorder %s16, 4
      %s26 = sphi 0, %s28
      %s29 = sphi 0, %s26
      %s30 = sphi 0, %s29
      %s46 = sphi 0, %s30
      %s50 = sphi 0, %s50
      %s52 = sphi 0, %s50
      %s53 = sphi 0, %s52
      %s67 = sphi 0, %s53
      %s71 = sphi 0, %s71
      %s73 = sphi 0, %s71
      %s74 = sphi 0, %s73
      %s88 = sphi 0, %s74
      %s92 = sphi 0, %s92
      %s94 = sphi 0, %s92
      %s95 = sphi 0, %s94
      %s109 = sphi 0, %s95
      %s113 = sphi 0, %s113
      %s115 = sphi 0, %s113
      %s116 = sphi 0, %s115
      %s130 = sphi 0, %s116
      %s134 = sphi 0, %s134
      %s136 = sphi 0, %s134
      %s137 = sphi 0, %s136
      %s151 = sphi 0, %s137
      %s155 = sphi 0, %s155
      %s157 = sphi 0, %s155
      %s158 = sphi 0, %s157
      %s172 = sphi 0, %s158
      %s178 = sphi 0, %s180
      %s181 = sphi 0, %s178
      %s182 = sphi 0, %s181
      %s198 = sphi 0, %s182
    $region4: #{tpu_custom_call.1} parent=1 // loop_header_branch
      %19 = sbr.rel (%p17) target = $region8
    $region5: #{tpu_custom_call.1} parent=1 // loop_body
      %s21 = ssub.s32 %s16, 1
      %s22 = ssub.s32 %s16, 2
      %s23 = sadd.s32 %s16, 1
      %s24 = ssub.s32 %s16, %s23
      %p25 = scmp.eq.s32.totalorder %s24, 0
      %s27 = sadd.s32 %s26, 1
      %s28 = scalar_select %p25, %s26, %s27
      %p31 = pneg %p25
      %p32 = scmp.eq.s32.totalorder %s16, 1
      %p33 = por %p31, %p32
      %p34 = scmp.ne.s32.totalorder %s26, %s29
      %p35 = scmp.eq.s32.totalorder %s16, 0
      %p36 = por %p34, %p35
      %p37 = scmp.ne.s32.totalorder %s26, %s29
      %p38 = scmp.eq.s32.totalorder %s21, 1
      %p39 = por %p37, %p38
      %p40 = scmp.ne.s32.totalorder %s29, %s30
      %p41 = scmp.eq.s32.totalorder %s21, 0
      %p42 = por %p40, %p41
      %p43 = scmp.ne.s32.totalorder %s29, %s30
      %p44 = scmp.eq.s32.totalorder %s22, 1
      %p45 = por %p43, %p44
      %p47 = scmp.ne.s32.totalorder %s30, %s46
      %p48 = scmp.eq.s32.totalorder %s22, 0
      %p49 = por %p47, %p48
      %s51 = sadd.s32 %s50, 1
      %p54 = scmp.eq.s32.totalorder %s16, 1
      %p55 = scmp.ne.s32.totalorder %s50, %s52
      %p56 = scmp.eq.s32.totalorder %s16, 0
      %p57 = por %p55, %p56
      %p58 = scmp.ne.s32.totalorder %s50, %s52
      %p59 = scmp.eq.s32.totalorder %s21, 1
      %p60 = por %p58, %p59
      %p61 = scmp.ne.s32.totalorder %s52, %s53
      %p62 = scmp.eq.s32.totalorder %s21, 0
      %p63 = por %p61, %p62
      %p64 = scmp.ne.s32.totalorder %s52, %s53
      %p65 = scmp.eq.s32.totalorder %s22, 1
      %p66 = por %p64, %p65
      %p68 = scmp.ne.s32.totalorder %s53, %s67
      %p69 = scmp.eq.s32.totalorder %s22, 0
      %p70 = por %p68, %p69
      %s72 = sadd.s32 %s71, 1
      %p75 = scmp.eq.s32.totalorder %s16, 1
      %p76 = scmp.ne.s32.totalorder %s71, %s73
      %p77 = scmp.eq.s32.totalorder %s16, 0
      %p78 = por %p76, %p77
      %p79 = scmp.ne.s32.totalorder %s71, %s73
      %p80 = scmp.eq.s32.totalorder %s21, 1
      %p81 = por %p79, %p80
      %p82 = scmp.ne.s32.totalorder %s73, %s74
      %p83 = scmp.eq.s32.totalorder %s21, 0
      %p84 = por %p82, %p83
      %p85 = scmp.ne.s32.totalorder %s73, %s74
      %p86 = scmp.eq.s32.totalorder %s22, 1
      %p87 = por %p85, %p86
      %p89 = scmp.ne.s32.totalorder %s74, %s88
      %p90 = scmp.eq.s32.totalorder %s22, 0
      %p91 = por %p89, %p90
      %s93 = sadd.s32 %s92, 1
      %p96 = scmp.eq.s32.totalorder %s16, 1
      %p97 = scmp.ne.s32.totalorder %s92, %s94
      %p98 = scmp.eq.s32.totalorder %s16, 0
      %p99 = por %p97, %p98
      %p100 = scmp.ne.s32.totalorder %s92, %s94
      %p101 = scmp.eq.s32.totalorder %s21, 1
      %p102 = por %p100, %p101
      %p103 = scmp.ne.s32.totalorder %s94, %s95
      %p104 = scmp.eq.s32.totalorder %s21, 0
      %p105 = por %p103, %p104
      %p106 = scmp.ne.s32.totalorder %s94, %s95
      %p107 = scmp.eq.s32.totalorder %s22, 1
      %p108 = por %p106, %p107
      %p110 = scmp.ne.s32.totalorder %s95, %s109
      %p111 = scmp.eq.s32.totalorder %s22, 0
      %p112 = por %p110, %p111
      %s114 = sadd.s32 %s113, 1
      %p117 = scmp.eq.s32.totalorder %s16, 1
      %p118 = scmp.ne.s32.totalorder %s113, %s115
      %p119 = scmp.eq.s32.totalorder %s16, 0
      %p120 = por %p118, %p119
      %p121 = scmp.ne.s32.totalorder %s113, %s115
      %p122 = scmp.eq.s32.totalorder %s21, 1
      %p123 = por %p121, %p122
      %p124 = scmp.ne.s32.totalorder %s115, %s116
      %p125 = scmp.eq.s32.totalorder %s21, 0
      %p126 = por %p124, %p125
      %p127 = scmp.ne.s32.totalorder %s115, %s116
      %p128 = scmp.eq.s32.totalorder %s22, 1
      %p129 = por %p127, %p128
      %p131 = scmp.ne.s32.totalorder %s116, %s130
      %p132 = scmp.eq.s32.totalorder %s22, 0
      %p133 = por %p131, %p132
      %s135 = sadd.s32 %s134, 1
      %p138 = scmp.eq.s32.totalorder %s16, 1
      %p139 = scmp.ne.s32.totalorder %s134, %s136
      %p140 = scmp.eq.s32.totalorder %s16, 0
      %p141 = por %p139, %p140
      %p142 = scmp.ne.s32.totalorder %s134, %s136
      %p143 = scmp.eq.s32.totalorder %s21, 1
      %p144 = por %p142, %p143
      %p145 = scmp.ne.s32.totalorder %s136, %s137
      %p146 = scmp.eq.s32.totalorder %s21, 0
      %p147 = por %p145, %p146
      %p148 = scmp.ne.s32.totalorder %s136, %s137
      %p149 = scmp.eq.s32.totalorder %s22, 1
      %p150 = por %p148, %p149
      %p152 = scmp.ne.s32.totalorder %s137, %s151
      %p153 = scmp.eq.s32.totalorder %s22, 0
      %p154 = por %p152, %p153
      %s156 = sadd.s32 %s155, 1
      %p159 = scmp.eq.s32.totalorder %s16, 1
      %p160 = scmp.ne.s32.totalorder %s155, %s157
      %p161 = scmp.eq.s32.totalorder %s16, 0
      %p162 = por %p160, %p161
      %p163 = scmp.ne.s32.totalorder %s155, %s157
      %p164 = scmp.eq.s32.totalorder %s21, 1
      %p165 = por %p163, %p164
      %p166 = scmp.ne.s32.totalorder %s157, %s158
      %p167 = scmp.eq.s32.totalorder %s21, 0
      %p168 = por %p166, %p167
      %p169 = scmp.ne.s32.totalorder %s157, %s158
      %p170 = scmp.eq.s32.totalorder %s22, 1
      %p171 = por %p169, %p170
      %p173 = scmp.ne.s32.totalorder %s158, %s172
      %p174 = scmp.eq.s32.totalorder %s22, 0
      %p175 = por %p173, %p174
      %s176 = ssub.s32 %s16, %s23
      %p177 = scmp.eq.s32.totalorder %s176, 0
      %s179 = sadd.s32 %s178, 1
      %s180 = scalar_select %p177, %s178, %s179
      %p183 = pneg %p177
      %p184 = scmp.eq.s32.totalorder %s16, 1
      %p185 = por %p183, %p184
      %p186 = scmp.ne.s32.totalorder %s178, %s181
      %p187 = scmp.eq.s32.totalorder %s16, 0
      %p188 = por %p186, %p187
      %p189 = scmp.ne.s32.totalorder %s178, %s181
      %p190 = scmp.eq.s32.totalorder %s21, 1
      %p191 = por %p189, %p190
      %p192 = scmp.ne.s32.totalorder %s181, %s182
      %p193 = scmp.eq.s32.totalorder %s21, 0
      %p194 = por %p192, %p193
      %p195 = scmp.ne.s32.totalorder %s181, %s182
      %p196 = scmp.eq.s32.totalorder %s22, 1
      %p197 = por %p195, %p196
      %p199 = scmp.ne.s32.totalorder %s182, %s198
      %p200 = scmp.eq.s32.totalorder %s22, 0
      %p201 = por %p199, %p200
      %p202 = scmp.le.s32.totalorder 1, %s16
      %p203 = scmp.lt.s32.totalorder %s16, 3
      %p204 = pnand %p202, %p203
      %p205 = pneg %p204
      // Predicated region
      $region9: #{tpu_custom_call.1} parent=5 // pred_check
        _
      $region10: #{tpu_custom_call.1} parent=5 // pred_check_branch
        %207 = sbr.rel (%p204) target = $region12
      $region11: #{tpu_custom_call.1} parent=5 // pred_region
        %s208 = ssub.s32 %s16, 1
        // Predicated region
        $region13: #{tpu_custom_call.1} parent=11 // pred_check
          %p209 = pneg %p63
        $region14: #{tpu_custom_call.1} parent=11 // pred_check_branch
          %211 = sbr.rel (%p209) target = $region16
        $region15: #{tpu_custom_call.1} parent=11 // pred_region
          _
        $region16: #{tpu_custom_call.1} parent=11 // pred_fallthru
          _
        // Predicated region
        $region17: #{tpu_custom_call.1} parent=11 // pred_check
          %p212 = pneg %p84
        $region18: #{tpu_custom_call.1} parent=11 // pred_check_branch
          %214 = sbr.rel (%p212) target = $region20
        $region19: #{tpu_custom_call.1} parent=11 // pred_region
          _
        $region20: #{tpu_custom_call.1} parent=11 // pred_fallthru
          _
        // Predicated region
        $region21: #{tpu_custom_call.1} parent=11 // pred_check
          %p215 = pneg %p105
        $region22: #{tpu_custom_call.1} parent=11 // pred_check_branch
          %217 = sbr.rel (%p215) target = $region24
        $region23: #{tpu_custom_call.1} parent=11 // pred_region
          _
        $region24: #{tpu_custom_call.1} parent=11 // pred_fallthru
          _
        // Predicated region
        $region25: #{tpu_custom_call.1} parent=11 // pred_check
          %p218 = pneg %p126
        $region26: #{tpu_custom_call.1} parent=11 // pred_check_branch
          %220 = sbr.rel (%p218) target = $region28
        $region27: #{tpu_custom_call.1} parent=11 // pred_region
          _
        $region28: #{tpu_custom_call.1} parent=11 // pred_fallthru
          _
        // Predicated region
        $region29: #{tpu_custom_call.1} parent=11 // pred_check
          %p221 = pneg %p147
        $region30: #{tpu_custom_call.1} parent=11 // pred_check_branch
          %223 = sbr.rel (%p221) target = $region32
        $region31: #{tpu_custom_call.1} parent=11 // pred_region
          _
        $region32: #{tpu_custom_call.1} parent=11 // pred_fallthru
          _
        // Predicated region
        $region33: #{tpu_custom_call.1} parent=11 // pred_check
          %p224 = pneg %p168
        $region34: #{tpu_custom_call.1} parent=11 // pred_check_branch
          %226 = sbr.rel (%p224) target = $region36
        $region35: #{tpu_custom_call.1} parent=11 // pred_region
          _
        $region36: #{tpu_custom_call.1} parent=11 // pred_fallthru
          _
      $region12: #{tpu_custom_call.1} parent=5 // pred_fallthru
        _
      %p227 = scmp.lt.s32.totalorder %s16, 2
      // Predicated region
      $region37: #{tpu_custom_call.1} parent=5 // pred_check
        %p228 = pneg %p227
      $region38: #{tpu_custom_call.1} parent=5 // pred_check_branch
        %230 = sbr.rel (%p228) target = $region40
      $region39: #{tpu_custom_call.1} parent=5 // pred_region
        // Predicated region
        $region41: #{tpu_custom_call.1} parent=39 // pred_check
          %p231 = pneg %p36
        $region42: #{tpu_custom_call.1} parent=39 // pred_check_branch
          %233 = sbr.rel (%p231) target = $region44
        $region43: #{tpu_custom_call.1} parent=39 // pred_region
          %s234 = smul.u32 16, %s16
          %p235 = scmp.lt.s32.totalorder %s234, 31
          %s236 = scalar_select %p235, %s234, 31
          %s237 = smul.addr %s236, 8
          %s238 = scalar_lea.vmem %s0, %s237
          %s239 = smul.u32 16, %s16
        $region44: #{tpu_custom_call.1} parent=39 // pred_fallthru
          _
      $region40: #{tpu_custom_call.1} parent=5 // pred_fallthru
        _
      %p240 = scmp.le.s32.totalorder 1, %s16
      %p241 = scmp.lt.s32.totalorder %s16, 3
      %p242 = pnand %p240, %p241
      %p243 = pneg %p242
      // Predicated region
      $region45: #{tpu_custom_call.1} parent=5 // pred_check
        _
      $region46: #{tpu_custom_call.1} parent=5 // pred_check_branch
        %245 = sbr.rel (%p242) target = $region48
      $region47: #{tpu_custom_call.1} parent=5 // pred_region
        %s246 = ssub.s32 %s16, 1
        %s247 = smul.u32 16, %s21
        %p248 = scmp.lt.s32.totalorder %s247, 31
        %s249 = scalar_select %p248, %s247, 31
        %s250 = smul.addr %s249, 8
        %s251 = scalar_lea.vmem %s0, %s250
        %p252 = pneg %p42
        %p253 = pneg %p39
        %p254 = pneg %p63
        %p255 = pneg %p60
        %p256 = pneg %p84
        %p257 = pneg %p81
        %p258 = pneg %p105
        %p259 = pneg %p102
        %p260 = pneg %p126
        %p261 = pneg %p123
        %p262 = pneg %p147
        %p263 = pneg %p144
        %p264 = pneg %p168
        %p265 = pneg %p165
        %p266 = pneg %p194
        %p267 = pneg %p191
        %s268 = sand.u32 %s181, 1
        %s269 = scalar_lea.sflag [#allocation3], %s268
        %s270 = sand.u32 %s181, 1
        %s271 = smul.addr %s270, 128
        %s272 = scalar_lea.vmem [#allocation2], %s271
        %s273 = smul.u32 16, %s21
        %p274 = scmp.lt.s32.totalorder %s273, 31
        %s275 = scalar_select %p274, %s273, 31
        %s276 = smul.addr %s275, 8
        %s277 = scalar_lea.vmem %s0, %s276
        %s278 = smul.u32 16, %s21
        %s279 = smul.u32 16, %s21
        %v280 = vld [vmem:[%s277] sm:$0xff]
        %v281 = vld [vmem:[%s277 + $0x8] sm:$0xff]
        %v282 = vld [vmem:[%s277 + $0x10] sm:$0xff]
        %v283 = vld [vmem:[%s277 + $0x18] sm:$0xff]
        %v284 = vld [vmem:[%s277 + $0x20] sm:$0xff]
        %v285 = vld [vmem:[%s277 + $0x28] sm:$0xff]
        %v286 = vld [vmem:[%s277 + $0x30] sm:$0xff]
        %v287 = vld [vmem:[%s277 + $0x38] sm:$0xff]
        %v288 = vld [vmem:[%s277 + $0x40] sm:$0xff]
        %v289 = vld [vmem:[%s277 + $0x48] sm:$0xff]
        %v290 = vld [vmem:[%s277 + $0x50] sm:$0xff]
        %v291 = vld [vmem:[%s277 + $0x58] sm:$0xff]
        %v292 = vld [vmem:[%s277 + $0x60] sm:$0xff]
        %v293 = vld [vmem:[%s277 + $0x68] sm:$0xff]
        %v294 = vld [vmem:[%s277 + $0x70] sm:$0xff]
        %v295 = vld [vmem:[%s277 + $0x78] sm:$0xff]
        %v296 = vld [vmem:[%s1] sm:$0xff]
        %v297 = vld [vmem:[%s2] sm:$0x1]
        %v299 = vlaneseq
        %v300 = vshrl.u32 %v299, 7
        %v301 = vsub.s32 0, %v300
        %v302 = vrot.slane %v297, %v301
        %vm304 = vcmask 64512
        %v306 = vsel %vm304, %v280, 0
        %v309 = vsel %vm304, %v281, 0
        %v312 = vsel %vm304, %v282, 0
        %v315 = vsel %vm304, %v283, 0
        %v318 = vsel %vm304, %v284, 0
        %v321 = vsel %vm304, %v285, 0
        %v324 = vsel %vm304, %v286, 0
        %v327 = vsel %vm304, %v287, 0
        %v330 = vsel %vm304, %v288, 0
        %v333 = vsel %vm304, %v289, 0
        %v336 = vsel %vm304, %v290, 0
        %v339 = vsel %vm304, %v291, 0
        %v342 = vsel %vm304, %v292, 0
        %v345 = vsel %vm304, %v293, 0
        %v348 = vsel %vm304, %v294, 0
        %v351 = vsel %vm304, %v295, 0
        %353 = vmatprep.subr.mxu0 0.0
        %354 = vmatpush1.msra.mxu0 %v296
        %355 = vmatprep.subr.mxu0 0.0
        %356 = vmatpush1.msra.mxu0 0.0
        %357 = vmatprep.subr.mxu0 0.0
        %358 = vmatpush1.msra.mxu0 0.0
        %359 = vmatprep.subr.mxu0 0.0
        %360 = vmatpush1.msra.mxu0 0.0
        %361 = vmatprep.subr.mxu0 0.0
        %362 = vmatpush1.msra.mxu0 0.0
        %363 = vmatprep.subr.mxu0 0.0
        %364 = vmatpush1.msra.mxu0 0.0
        %365 = vmatprep.subr.mxu0 0.0
        %366 = vmatpush1.msra.mxu0 0.0
        %367 = vmatprep.subr.mxu0 0.0
        %368 = vmatpush1.msra.mxu0 0.0
        %369 = vmatprep.subr.mxu0 0.0
        %370 = vmatpush1.msra.mxu0 0.0
        %371 = vmatprep.subr.mxu0 0.0
        %372 = vmatpush1.msra.mxu0 0.0
        %373 = vmatprep.subr.mxu0 0.0
        %374 = vmatpush1.msra.mxu0 0.0
        %375 = vmatprep.subr.mxu0 0.0
        %376 = vmatpush1.msra.mxu0 0.0
        %377 = vmatprep.subr.mxu0 0.0
        %378 = vmatpush1.msra.mxu0 0.0
        %379 = vmatprep.subr.mxu0 0.0
        %380 = vmatpush1.msra.mxu0 0.0
        %381 = vmatprep.subr.mxu0 0.0
        %382 = vmatpush1.msra.mxu0 0.0
        %383 = vmatprep.subr.mxu0 0.0
        %384 = vmatpush1.msra.mxu0 0.0
        %385 = vmatprep.subr.mxu0 0.0
        %386 = vmatpush1.msra.mxu0 0.0
        %387 = vmatprep.subr.mxu0 0.0
        %388 = vmatpush1.msra.mxu0 0.0
        %389 = vmatprep.subr.mxu0 0.0
        %390 = vmatpush1.msra.mxu0 0.0
        %391 = vmatprep.subr.mxu0 0.0
        %392 = vmatpush1.msra.mxu0 0.0
        %393 = vmatprep.subr.mxu0 0.0
        %394 = vmatpush1.msra.mxu0 0.0
        %395 = vmatprep.subr.mxu0 0.0
        %396 = vmatpush1.msra.mxu0 0.0
        %397 = vmatprep.subr.mxu0 0.0
        %398 = vmatpush1.msra.mxu0 0.0
        %399 = vmatprep.subr.mxu0 0.0
        %400 = vmatpush1.msra.mxu0 0.0
        %401 = vmatprep.subr.mxu0 0.0
        %402 = vmatpush1.msra.mxu0 0.0
        %403 = vmatprep.subr.mxu0 0.0
        %404 = vmatpush1.msra.mxu0 0.0
        %405 = vmatprep.subr.mxu0 0.0
        %406 = vmatpush1.msra.mxu0 0.0
        %407 = vmatprep.subr.mxu0 0.0
        %408 = vmatpush1.msra.mxu0 0.0
        %409 = vmatprep.subr.mxu0 0.0
        %410 = vmatpush1.msra.mxu0 0.0
        %411 = vmatprep.subr.mxu0 0.0
        %412 = vmatpush1.msra.mxu0 0.0
        %413 = vmatprep.subr.mxu0 0.0
        %414 = vmatpush1.msra.mxu0 0.0
        %415 = vmatprep.subr.mxu0 0.0
        %416 = vmatpush1.msra.mxu0 0.0
        %417 = vmatprep.mubr.f32.mxu0 0.0
        %418 = vmatmul.mubr.f32.gmra.mrb[0].mxu0 %v306
        %v419 = vpop.f32.mrb[0].mxu0
        %v420 = vadd.f32 %v302, %v419
        %v421 = vpop.f32.mrb[0].mxu0
        %422 = vmatprep.mubr.f32.mxu0 0.0
        %423 = vmatmul.mubr.f32.gmra.mrb[0].mxu0 %v309
        %v424 = vpop.f32.mrb[0].mxu0
        %v425 = vadd.f32 %v302, %v424
        %v426 = vpop.f32.mrb[0].mxu0
        %427 = vmatprep.mubr.f32.mxu0 0.0
        %428 = vmatmul.mubr.f32.gmra.mrb[0].mxu0 %v312
        %v429 = vpop.f32.mrb[0].mxu0
        %v430 = vadd.f32 %v302, %v429
        %v431 = vpop.f32.mrb[0].mxu0
        %432 = vmatprep.mubr.f32.mxu0 0.0
        %433 = vmatmul.mubr.f32.gmra.mrb[0].mxu0 %v315
        %v434 = vpop.f32.mrb[0].mxu0
        %v435 = vadd.f32 %v302, %v434
        %v436 = vpop.f32.mrb[0].mxu0
        %437 = vmatprep.mubr.f32.mxu0 0.0
        %438 = vmatmul.mubr.f32.gmra.mrb[0].mxu0 %v318
        %v439 = vpop.f32.mrb[0].mxu0
        %v440 = vadd.f32 %v302, %v439
        %v441 = vpop.f32.mrb[0].mxu0
        %442 = vmatprep.mubr.f32.mxu0 0.0
        %443 = vmatmul.mubr.f32.gmra.mrb[0].mxu0 %v321
        %v444 = vpop.f32.mrb[0].mxu0
        %v445 = vadd.f32 %v302, %v444
        %v446 = vpop.f32.mrb[0].mxu0
        %447 = vmatprep.mubr.f32.mxu0 0.0
        %448 = vmatmul.mubr.f32.gmra.mrb[0].mxu0 %v324
        %v449 = vpop.f32.mrb[0].mxu0
        %v450 = vadd.f32 %v302, %v449
        %v451 = vpop.f32.mrb[0].mxu0
        %452 = vmatprep.mubr.f32.mxu0 0.0
        %453 = vmatmul.mubr.f32.gmra.mrb[0].mxu0 %v327
        %v454 = vpop.f32.mrb[0].mxu0
        %v455 = vadd.f32 %v302, %v454
        %v456 = vpop.f32.mrb[0].mxu0
        %457 = vmatprep.mubr.f32.mxu0 0.0
        %458 = vmatmul.mubr.f32.gmra.mrb[0].mxu0 %v330
        %v459 = vpop.f32.mrb[0].mxu0
        %v460 = vadd.f32 %v302, %v459
        %v461 = vpop.f32.mrb[0].mxu0
        %462 = vmatprep.mubr.f32.mxu0 0.0
        %463 = vmatmul.mubr.f32.gmra.mrb[0].mxu0 %v333
        %v464 = vpop.f32.mrb[0].mxu0
        %v465 = vadd.f32 %v302, %v464
        %v466 = vpop.f32.mrb[0].mxu0
        %467 = vmatprep.mubr.f32.mxu0 0.0
        %468 = vmatmul.mubr.f32.gmra.mrb[0].mxu0 %v336
        %v469 = vpop.f32.mrb[0].mxu0
        %v470 = vadd.f32 %v302, %v469
        %v471 = vpop.f32.mrb[0].mxu0
        %472 = vmatprep.mubr.f32.mxu0 0.0
        %473 = vmatmul.mubr.f32.gmra.mrb[0].mxu0 %v339
        %v474 = vpop.f32.mrb[0].mxu0
        %v475 = vadd.f32 %v302, %v474
        %v476 = vpop.f32.mrb[0].mxu0
        %477 = vmatprep.mubr.f32.mxu0 0.0
        %478 = vmatmul.mubr.f32.gmra.mrb[0].mxu0 %v342
        %v479 = vpop.f32.mrb[0].mxu0
        %v480 = vadd.f32 %v302, %v479
        %v481 = vpop.f32.mrb[0].mxu0
        %482 = vmatprep.mubr.f32.mxu0 0.0
        %483 = vmatmul.mubr.f32.gmra.mrb[0].mxu0 %v345
        %v484 = vpop.f32.mrb[0].mxu0
        %v485 = vadd.f32 %v302, %v484
        %v486 = vpop.f32.mrb[0].mxu0
        %487 = vmatprep.mubr.f32.mxu0 0.0
        %488 = vmatmul.mubr.f32.gmra.mrb[0].mxu0 %v348
        %v489 = vpop.f32.mrb[0].mxu0
        %v490 = vadd.f32 %v302, %v489
        %v491 = vpop.f32.mrb[0].mxu0
        %492 = vmatprep.mubr.f32.mxu0 0.0
        %493 = vmatmul.mubr.f32.gmra.mrb[0].mxu0 %v351
        %v494 = vpop.f32.mrb[0].mxu0
        %v495 = vadd.f32 %v302, %v494
        %v496 = vpop.f32.mrb[0].mxu0
        %497 = vdwg.mxu0
        %v498 = vmax.f32 %v420, 0.0
        %v499 = vmax.f32 %v425, 0.0
        %v500 = vmax.f32 %v430, 0.0
        %v501 = vmax.f32 %v435, 0.0
        %v502 = vmax.f32 %v440, 0.0
        %v503 = vmax.f32 %v445, 0.0
        %v504 = vmax.f32 %v450, 0.0
        %v505 = vmax.f32 %v455, 0.0
        %v506 = vmax.f32 %v460, 0.0
        %v507 = vmax.f32 %v465, 0.0
        %v508 = vmax.f32 %v470, 0.0
        %v509 = vmax.f32 %v475, 0.0
        %v510 = vmax.f32 %v480, 0.0
        %v511 = vmax.f32 %v485, 0.0
        %v512 = vmax.f32 %v490, 0.0
        %v513 = vmax.f32 %v495, 0.0
        %v514 = vld [vmem:[%s3] sm:$0xff]
        %v515 = vld [vmem:[%s3 + $0x8] sm:$0xff]
        %v516 = vld [vmem:[%s3 + $0x10] sm:$0xff]
        %v517 = vld [vmem:[%s3 + $0x18] sm:$0xff]
        %v518 = vld [vmem:[%s4] sm:$0x1]
        %v520 = vlaneseq
        %v521 = vshrl.u32 %v520, 7
        %v522 = vsub.s32 0, %v521
        %v523 = vrot.slane %v518, %v522
        %vm525 = vcmask 261120
        %v527 = vsel %vm525, %v498, 0
        %v530 = vsel %vm525, %v499, 0
        %v533 = vsel %vm525, %v500, 0
        %v536 = vsel %vm525, %v501, 0
        %v539 = vsel %vm525, %v502, 0
        %v542 = vsel %vm525, %v503, 0
        %v545 = vsel %vm525, %v504, 0
        %v548 = vsel %vm525, %v505, 0
        %v551 = vsel %vm525, %v506, 0
        %v554 = vsel %vm525, %v507, 0
        %v557 = vsel %vm525, %v508, 0
        %v560 = vsel %vm525, %v509, 0
        %v563 = vsel %vm525, %v510, 0
        %v566 = vsel %vm525, %v511, 0
        %v569 = vsel %vm525, %v512, 0
        %v572 = vsel %vm525, %v513, 0
        %574 = vmatprep.subr.mxu0 0.0
        %575 = vmatpush1.msra.mxu0 %v514
        %576 = vmatprep.subr.mxu0 0.0
        %577 = vmatpush1.msra.mxu0 %v515
        %578 = vmatprep.subr.mxu0 0.0
        %579 = vmatpush1.msra.mxu0 %v516
        %580 = vmatprep.subr.mxu0 0.0
        %581 = vmatpush1.msra.mxu0 %v517
        %582 = vmatprep.subr.mxu0 0.0
        %583 = vmatpush1.msra.mxu0 0.0
        %584 = vmatprep.subr.mxu0 0.0
        %585 = vmatpush1.msra.mxu0 0.0
        %586 = vmatprep.subr.mxu0 0.0
        %587 = vmatpush1.msra.mxu0 0.0
        %588 = vmatprep.subr.mxu0 0.0
        %589 = vmatpush1.msra.mxu0 0.0
        %590 = vmatprep.subr.mxu0 0.0
        %591 = vmatpush1.msra.mxu0 0.0
        %592 = vmatprep.subr.mxu0 0.0
        %593 = vmatpush1.msra.mxu0 0.0
        %594 = vmatprep.subr.mxu0 0.0
        %595 = vmatpush1.msra.mxu0 0.0
        %596 = vmatprep.subr.mxu0 0.0
        %597 = vmatpush1.msra.mxu0 0.0
        %598 = vmatprep.subr.mxu0 0.0
        %599 = vmatpush1.msra.mxu0 0.0
        %600 = vmatprep.subr.mxu0 0.0
        %601 = vmatpush1.msra.mxu0 0.0
        %602 = vmatprep.subr.mxu0 0.0
        %603 = vmatpush1.msra.mxu0 0.0
        %604 = vmatprep.subr.mxu0 0.0
        %605 = vmatpush1.msra.mxu0 0.0
        %606 = vmatprep.subr.mxu0 0.0
        %607 = vmatpush1.msra.mxu0 0.0
        %608 = vmatprep.subr.mxu0 0.0
        %609 = vmatpush1.msra.mxu0 0.0
        %610 = vmatprep.subr.mxu0 0.0
        %611 = vmatpush1.msra.mxu0 0.0
        %612 = vmatprep.subr.mxu0 0.0
        %613 = vmatpush1.msra.mxu0 0.0
        %614 = vmatprep.subr.mxu0 0.0
        %615 = vmatpush1.msra.mxu0 0.0
        %616 = vmatprep.subr.mxu0 0.0
        %617 = vmatpush1.msra.mxu0 0.0
        %618 = vmatprep.subr.mxu0 0.0
        %619 = vmatpush1.msra.mxu0 0.0
        %620 = vmatprep.subr.mxu0 0.0
        %621 = vmatpush1.msra.mxu0 0.0
        %622 = vmatprep.subr.mxu0 0.0
        %623 = vmatpush1.msra.mxu0 0.0
        %624 = vmatprep.subr.mxu0 0.0
        %625 = vmatpush1.msra.mxu0 0.0
        %626 = vmatprep.subr.mxu0 0.0
        %627 = vmatpush1.msra.mxu0 0.0
        %628 = vmatprep.subr.mxu0 0.0
        %629 = vmatpush1.msra.mxu0 0.0
        %630 = vmatprep.subr.mxu0 0.0
        %631 = vmatpush1.msra.mxu0 0.0
        %632 = vmatprep.subr.mxu0 0.0
        %633 = vmatpush1.msra.mxu0 0.0
        %634 = vmatprep.subr.mxu0 0.0
        %635 = vmatpush1.msra.mxu0 0.0
        %636 = vmatprep.subr.mxu0 0.0
        %637 = vmatpush1.msra.mxu0 0.0
        %638 = vmatprep.mubr.f32.mxu0 0.0
        %639 = vmatmul.mubr.f32.gmra.mrb[0].mxu0 %v527
        %v640 = vpop.f32.mrb[0].mxu0
        %v641 = vadd.f32 %v523, %v640
        %v642 = vpop.f32.mrb[0].mxu0
        %643 = vmatprep.mubr.f32.mxu0 0.0
        %644 = vmatmul.mubr.f32.gmra.mrb[0].mxu0 %v530
        %v645 = vpop.f32.mrb[0].mxu0
        %v646 = vadd.f32 %v523, %v645
        %v647 = vpop.f32.mrb[0].mxu0
        %648 = vmatprep.mubr.f32.mxu0 0.0
        %649 = vmatmul.mubr.f32.gmra.mrb[0].mxu0 %v533
        %v650 = vpop.f32.mrb[0].mxu0
        %v651 = vadd.f32 %v523, %v650
        %v652 = vpop.f32.mrb[0].mxu0
        %653 = vmatprep.mubr.f32.mxu0 0.0
        %654 = vmatmul.mubr.f32.gmra.mrb[0].mxu0 %v536
        %v655 = vpop.f32.mrb[0].mxu0
        %v656 = vadd.f32 %v523, %v655
        %v657 = vpop.f32.mrb[0].mxu0
        %658 = vmatprep.mubr.f32.mxu0 0.0
        %659 = vmatmul.mubr.f32.gmra.mrb[0].mxu0 %v539
        %v660 = vpop.f32.mrb[0].mxu0
        %v661 = vadd.f32 %v523, %v660
        %v662 = vpop.f32.mrb[0].mxu0
        %663 = vmatprep.mubr.f32.mxu0 0.0
        %664 = vmatmul.mubr.f32.gmra.mrb[0].mxu0 %v542
        %v665 = vpop.f32.mrb[0].mxu0
        %v666 = vadd.f32 %v523, %v665
        %v667 = vpop.f32.mrb[0].mxu0
        %668 = vmatprep.mubr.f32.mxu0 0.0
        %669 = vmatmul.mubr.f32.gmra.mrb[0].mxu0 %v545
        %v670 = vpop.f32.mrb[0].mxu0
        %v671 = vadd.f32 %v523, %v670
        %v672 = vpop.f32.mrb[0].mxu0
        %673 = vmatprep.mubr.f32.mxu0 0.0
        %674 = vmatmul.mubr.f32.gmra.mrb[0].mxu0 %v548
        %v675 = vpop.f32.mrb[0].mxu0
        %v676 = vadd.f32 %v523, %v675
        %v677 = vpop.f32.mrb[0].mxu0
        %678 = vmatprep.mubr.f32.mxu0 0.0
        %679 = vmatmul.mubr.f32.gmra.mrb[0].mxu0 %v551
        %v680 = vpop.f32.mrb[0].mxu0
        %v681 = vadd.f32 %v523, %v680
        %v682 = vpop.f32.mrb[0].mxu0
        %683 = vmatprep.mubr.f32.mxu0 0.0
        %684 = vmatmul.mubr.f32.gmra.mrb[0].mxu0 %v554
        %v685 = vpop.f32.mrb[0].mxu0
        %v686 = vadd.f32 %v523, %v685
        %v687 = vpop.f32.mrb[0].mxu0
        %688 = vmatprep.mubr.f32.mxu0 0.0
        %689 = vmatmul.mubr.f32.gmra.mrb[0].mxu0 %v557
        %v690 = vpop.f32.mrb[0].mxu0
        %v691 = vadd.f32 %v523, %v690
        %v692 = vpop.f32.mrb[0].mxu0
        %693 = vmatprep.mubr.f32.mxu0 0.0
        %694 = vmatmul.mubr.f32.gmra.mrb[0].mxu0 %v560
        %v695 = vpop.f32.mrb[0].mxu0
        %v696 = vadd.f32 %v523, %v695
        %v697 = vpop.f32.mrb[0].mxu0
        %698 = vmatprep.mubr.f32.mxu0 0.0
        %699 = vmatmul.mubr.f32.gmra.mrb[0].mxu0 %v563
        %v700 = vpop.f32.mrb[0].mxu0
        %v701 = vadd.f32 %v523, %v700
        %v702 = vpop.f32.mrb[0].mxu0
        %703 = vmatprep.mubr.f32.mxu0 0.0
        %704 = vmatmul.mubr.f32.gmra.mrb[0].mxu0 %v566
        %v705 = vpop.f32.mrb[0].mxu0
        %v706 = vadd.f32 %v523, %v705
        %v707 = vpop.f32.mrb[0].mxu0
        %708 = vmatprep.mubr.f32.mxu0 0.0
        %709 = vmatmul.mubr.f32.gmra.mrb[0].mxu0 %v569
        %v710 = vpop.f32.mrb[0].mxu0
        %v711 = vadd.f32 %v523, %v710
        %v712 = vpop.f32.mrb[0].mxu0
        %713 = vmatprep.mubr.f32.mxu0 0.0
        %714 = vmatmul.mubr.f32.gmra.mrb[0].mxu0 %v572
        %v715 = vpop.f32.mrb[0].mxu0
        %v716 = vadd.f32 %v523, %v715
        %v717 = vpop.f32.mrb[0].mxu0
        %718 = vdwg.mxu0
        %v719 = vmax.f32 %v641, 0.0
        %v720 = vmax.f32 %v646, 0.0
        %v721 = vmax.f32 %v651, 0.0
        %v722 = vmax.f32 %v656, 0.0
        %v723 = vmax.f32 %v661, 0.0
        %v724 = vmax.f32 %v666, 0.0
        %v725 = vmax.f32 %v671, 0.0
        %v726 = vmax.f32 %v676, 0.0
        %v727 = vmax.f32 %v681, 0.0
        %v728 = vmax.f32 %v686, 0.0
        %v729 = vmax.f32 %v691, 0.0
        %v730 = vmax.f32 %v696, 0.0
        %v731 = vmax.f32 %v701, 0.0
        %v732 = vmax.f32 %v706, 0.0
        %v733 = vmax.f32 %v711, 0.0
        %v734 = vmax.f32 %v716, 0.0
        %v735 = vld [vmem:[%s5] sm:$0xff]
        %v736 = vld [vmem:[%s5 + $0x8] sm:$0xff]
        %v737 = vld [vmem:[%s5 + $0x10] sm:$0xff]
        %v738 = vld [vmem:[%s5 + $0x18] sm:$0xff]
        %v739 = vld [vmem:[%s6] sm:$0x1]
        %v741 = vlaneseq
        %v742 = vshrl.u32 %v741, 7
        %v743 = vsub.s32 0, %v742
        %v744 = vrot.slane %v739, %v743
        %v747 = vsel %vm525, %v719, 0
        %v750 = vsel %vm525, %v720, 0
        %v753 = vsel %vm525, %v721, 0
        %v756 = vsel %vm525, %v722, 0
        %v759 = vsel %vm525, %v723, 0
        %v762 = vsel %vm525, %v724, 0
        %v765 = vsel %vm525, %v725, 0
        %v768 = vsel %vm525, %v726, 0
        %v771 = vsel %vm525, %v727, 0
        %v774 = vsel %vm525, %v728, 0
        %v777 = vsel %vm525, %v729, 0
        %v780 = vsel %vm525, %v730, 0
        %v783 = vsel %vm525, %v731, 0
        %v786 = vsel %vm525, %v732, 0
        %v789 = vsel %vm525, %v733, 0
        %v792 = vsel %vm525, %v734, 0
        %794 = vmatprep.subr.mxu0 0.0
        %795 = vmatpush1.msra.mxu0 %v735
        %796 = vmatprep.subr.mxu0 0.0
        %797 = vmatpush1.msra.mxu0 %v736
        %798 = vmatprep.subr.mxu0 0.0
        %799 = vmatpush1.msra.mxu0 %v737
        %800 = vmatprep.subr.mxu0 0.0
        %801 = vmatpush1.msra.mxu0 %v738
        %802 = vmatprep.subr.mxu0 0.0
        %803 = vmatpush1.msra.mxu0 0.0
        %804 = vmatprep.subr.mxu0 0.0
        %805 = vmatpush1.msra.mxu0 0.0
        %806 = vmatprep.subr.mxu0 0.0
        %807 = vmatpush1.msra.mxu0 0.0
        %808 = vmatprep.subr.mxu0 0.0
        %809 = vmatpush1.msra.mxu0 0.0
        %810 = vmatprep.subr.mxu0 0.0
        %811 = vmatpush1.msra.mxu0 0.0
        %812 = vmatprep.subr.mxu0 0.0
        %813 = vmatpush1.msra.mxu0 0.0
        %814 = vmatprep.subr.mxu0 0.0
        %815 = vmatpush1.msra.mxu0 0.0
        %816 = vmatprep.subr.mxu0 0.0
        %817 = vmatpush1.msra.mxu0 0.0
        %818 = vmatprep.subr.mxu0 0.0
        %819 = vmatpush1.msra.mxu0 0.0
        %820 = vmatprep.subr.mxu0 0.0
        %821 = vmatpush1.msra.mxu0 0.0
        %822 = vmatprep.subr.mxu0 0.0
        %823 = vmatpush1.msra.mxu0 0.0
        %824 = vmatprep.subr.mxu0 0.0
        %825 = vmatpush1.msra.mxu0 0.0
        %826 = vmatprep.subr.mxu0 0.0
        %827 = vmatpush1.msra.mxu0 0.0
        %828 = vmatprep.subr.mxu0 0.0
        %829 = vmatpush1.msra.mxu0 0.0
        %830 = vmatprep.subr.mxu0 0.0
        %831 = vmatpush1.msra.mxu0 0.0
        %832 = vmatprep.subr.mxu0 0.0
        %833 = vmatpush1.msra.mxu0 0.0
        %834 = vmatprep.subr.mxu0 0.0
        %835 = vmatpush1.msra.mxu0 0.0
        %836 = vmatprep.subr.mxu0 0.0
        %837 = vmatpush1.msra.mxu0 0.0
        %838 = vmatprep.subr.mxu0 0.0
        %839 = vmatpush1.msra.mxu0 0.0
        %840 = vmatprep.subr.mxu0 0.0
        %841 = vmatpush1.msra.mxu0 0.0
        %842 = vmatprep.subr.mxu0 0.0
        %843 = vmatpush1.msra.mxu0 0.0
        %844 = vmatprep.subr.mxu0 0.0
        %845 = vmatpush1.msra.mxu0 0.0
        %846 = vmatprep.subr.mxu0 0.0
        %847 = vmatpush1.msra.mxu0 0.0
        %848 = vmatprep.subr.mxu0 0.0
        %849 = vmatpush1.msra.mxu0 0.0
        %850 = vmatprep.subr.mxu0 0.0
        %851 = vmatpush1.msra.mxu0 0.0
        %852 = vmatprep.subr.mxu0 0.0
        %853 = vmatpush1.msra.mxu0 0.0
        %854 = vmatprep.subr.mxu0 0.0
        %855 = vmatpush1.msra.mxu0 0.0
        %856 = vmatprep.subr.mxu0 0.0
        %857 = vmatpush1.msra.mxu0 0.0
        %858 = vmatprep.mubr.f32.mxu0 0.0
        %859 = vmatmul.mubr.f32.gmra.mrb[0].mxu0 %v747
        %v860 = vpop.f32.mrb[0].mxu0
        %v861 = vadd.f32 %v744, %v860
        %v862 = vpop.f32.mrb[0].mxu0
        %863 = vmatprep.mubr.f32.mxu0 0.0
        %864 = vmatmul.mubr.f32.gmra.mrb[0].mxu0 %v750
        %v865 = vpop.f32.mrb[0].mxu0
        %v866 = vadd.f32 %v744, %v865
        %v867 = vpop.f32.mrb[0].mxu0
        %868 = vmatprep.mubr.f32.mxu0 0.0
        %869 = vmatmul.mubr.f32.gmra.mrb[0].mxu0 %v753
        %v870 = vpop.f32.mrb[0].mxu0
        %v871 = vadd.f32 %v744, %v870
        %v872 = vpop.f32.mrb[0].mxu0
        %873 = vmatprep.mubr.f32.mxu0 0.0
        %874 = vmatmul.mubr.f32.gmra.mrb[0].mxu0 %v756
        %v875 = vpop.f32.mrb[0].mxu0
        %v876 = vadd.f32 %v744, %v875
        %v877 = vpop.f32.mrb[0].mxu0
        %878 = vmatprep.mubr.f32.mxu0 0.0
        %879 = vmatmul.mubr.f32.gmra.mrb[0].mxu0 %v759
        %v880 = vpop.f32.mrb[0].mxu0
        %v881 = vadd.f32 %v744, %v880
        %v882 = vpop.f32.mrb[0].mxu0
        %883 = vmatprep.mubr.f32.mxu0 0.0
        %884 = vmatmul.mubr.f32.gmra.mrb[0].mxu0 %v762
        %v885 = vpop.f32.mrb[0].mxu0
        %v886 = vadd.f32 %v744, %v885
        %v887 = vpop.f32.mrb[0].mxu0
        %888 = vmatprep.mubr.f32.mxu0 0.0
        %889 = vmatmul.mubr.f32.gmra.mrb[0].mxu0 %v765
        %v890 = vpop.f32.mrb[0].mxu0
        %v891 = vadd.f32 %v744, %v890
        %v892 = vpop.f32.mrb[0].mxu0
        %893 = vmatprep.mubr.f32.mxu0 0.0
        %894 = vmatmul.mubr.f32.gmra.mrb[0].mxu0 %v768
        %v895 = vpop.f32.mrb[0].mxu0
        %v896 = vadd.f32 %v744, %v895
        %v897 = vpop.f32.mrb[0].mxu0
        %898 = vmatprep.mubr.f32.mxu0 0.0
        %899 = vmatmul.mubr.f32.gmra.mrb[0].mxu0 %v771
        %v900 = vpop.f32.mrb[0].mxu0
        %v901 = vadd.f32 %v744, %v900
        %v902 = vpop.f32.mrb[0].mxu0
        %903 = vmatprep.mubr.f32.mxu0 0.0
        %904 = vmatmul.mubr.f32.gmra.mrb[0].mxu0 %v774
        %v905 = vpop.f32.mrb[0].mxu0
        %v906 = vadd.f32 %v744, %v905
        %v907 = vpop.f32.mrb[0].mxu0
        %908 = vmatprep.mubr.f32.mxu0 0.0
        %909 = vmatmul.mubr.f32.gmra.mrb[0].mxu0 %v777
        %v910 = vpop.f32.mrb[0].mxu0
        %v911 = vadd.f32 %v744, %v910
        %v912 = vpop.f32.mrb[0].mxu0
        %913 = vmatprep.mubr.f32.mxu0 0.0
        %914 = vmatmul.mubr.f32.gmra.mrb[0].mxu0 %v780
        %v915 = vpop.f32.mrb[0].mxu0
        %v916 = vadd.f32 %v744, %v915
        %v917 = vpop.f32.mrb[0].mxu0
        %918 = vmatprep.mubr.f32.mxu0 0.0
        %919 = vmatmul.mubr.f32.gmra.mrb[0].mxu0 %v783
        %v920 = vpop.f32.mrb[0].mxu0
        %v921 = vadd.f32 %v744, %v920
        %v922 = vpop.f32.mrb[0].mxu0
        %923 = vmatprep.mubr.f32.mxu0 0.0
        %924 = vmatmul.mubr.f32.gmra.mrb[0].mxu0 %v786
        %v925 = vpop.f32.mrb[0].mxu0
        %v926 = vadd.f32 %v744, %v925
        %v927 = vpop.f32.mrb[0].mxu0
        %928 = vmatprep.mubr.f32.mxu0 0.0
        %929 = vmatmul.mubr.f32.gmra.mrb[0].mxu0 %v789
        %v930 = vpop.f32.mrb[0].mxu0
        %v931 = vadd.f32 %v744, %v930
        %v932 = vpop.f32.mrb[0].mxu0
        %933 = vmatprep.mubr.f32.mxu0 0.0
        %934 = vmatmul.mubr.f32.gmra.mrb[0].mxu0 %v792
        %v935 = vpop.f32.mrb[0].mxu0
        %v936 = vadd.f32 %v744, %v935
        %v937 = vpop.f32.mrb[0].mxu0
        %938 = vdwg.mxu0
        %939 = vst [vmem:[%s272] sm:$0xff] %v861
        %940 = vst [vmem:[%s272 + $0x8] sm:$0xff] %v866
        %941 = vst [vmem:[%s272 + $0x10] sm:$0xff] %v871
        %942 = vst [vmem:[%s272 + $0x18] sm:$0xff] %v876
        %943 = vst [vmem:[%s272 + $0x20] sm:$0xff] %v881
        %944 = vst [vmem:[%s272 + $0x28] sm:$0xff] %v886
        %945 = vst [vmem:[%s272 + $0x30] sm:$0xff] %v891
        %946 = vst [vmem:[%s272 + $0x38] sm:$0xff] %v896
        %947 = vst [vmem:[%s272 + $0x40] sm:$0xff] %v901
        %948 = vst [vmem:[%s272 + $0x48] sm:$0xff] %v906
        %949 = vst [vmem:[%s272 + $0x50] sm:$0xff] %v911
        %950 = vst [vmem:[%s272 + $0x58] sm:$0xff] %v916
        %951 = vst [vmem:[%s272 + $0x60] sm:$0xff] %v921
        %952 = vst [vmem:[%s272 + $0x68] sm:$0xff] %v926
        %953 = vst [vmem:[%s272 + $0x70] sm:$0xff] %v931
        %954 = vst [vmem:[%s272 + $0x78] sm:$0xff] %v936
        %s955 = sand.u32 %s181, 1
        %s956 = scalar_lea.sflag [#allocation3], %s955
        %s957 = sand.u32 %s181, 1
        %s958 = smul.addr %s957, 128
        %s959 = scalar_lea.vmem [#allocation2], %s958
        // Predicated region
        $region49: #{tpu_custom_call.1} parent=47 // pred_check
          %p960 = pneg %p191
        $region50: #{tpu_custom_call.1} parent=47 // pred_check_branch
          %962 = sbr.rel (%p960) target = $region52
        $region51: #{tpu_custom_call.1} parent=47 // pred_region
          %s963 = smul.u32 16, %s21
          %s965 = ssub.s32 2048, 2048
          %966 = vsyncadd %s956, %s965
          %s967 = smul.addr %s963, 128
          %s968 = scalar_lea.hbm %s7, %s967
          %s969 = sshll.u32 %s959, 4
          %s970 = int_to_ptr.vmem [resolvable:$true] %s969
          %975 = dma.vmem_to_hbm [thread:$0]  %s970, 2048, %s968, %s956, 128, 128, 8
        $region52: #{tpu_custom_call.1} parent=47 // pred_fallthru
          _
      $region48: #{tpu_custom_call.1} parent=5 // pred_fallthru
        _
      %p976 = scmp.le.s32.totalorder 2, %s16
      // Predicated region
      $region53: #{tpu_custom_call.1} parent=5 // pred_check
        %p977 = pneg %p976
      $region54: #{tpu_custom_call.1} parent=5 // pred_check_branch
        %979 = sbr.rel (%p977) target = $region56
      $region55: #{tpu_custom_call.1} parent=5 // pred_region
        %s980 = ssub.s32 %s16, 2
        // Predicated region
        $region57: #{tpu_custom_call.1} parent=55 // pred_check
          %p981 = pneg %p197
        $region58: #{tpu_custom_call.1} parent=55 // pred_check_branch
          %983 = sbr.rel (%p981) target = $region60
        $region59: #{tpu_custom_call.1} parent=55 // pred_region
          %s984 = sand.u32 %s182, 1
          %s985 = scalar_lea.sflag [#allocation3], %s984
          %s986 = sand.u32 %s182, 1
          %s987 = smul.addr %s986, 128
          %s988 = scalar_lea.vmem [#allocation2], %s987
          %989 = dma.done %s985, 2048
        $region60: #{tpu_custom_call.1} parent=55 // pred_fallthru
          _
      $region56: #{tpu_custom_call.1} parent=5 // pred_fallthru
        _
    $region6: #{tpu_custom_call.1} parent=1 // loop_footer
      %s20 = sadd.s32 1, %s16
    $region7: #{tpu_custom_call.1} parent=1 // loop_footer_branch
      %15 = sbr.rel target = $region3
    $region8: #{tpu_custom_call.1} parent=1 // loop_exit
      _
    %990 = vsyncpa [#allocation3], 1
    %s991 = scalar_lea.sflag [#allocation3], 1
    %992 = vsyncpa %s991, 1

</llo_original>
